<compile_context>
chip_gen: v6e
topology: v6e:2x2x1
jax: 0.10.0
libtpu: 0.0.40
codegen_flags: <defaults>
</compile_context>

<pallas_src>
import jax
import jax.numpy as jnp
from jax.experimental import pallas as pl
from jax.experimental.pallas import tpu as pltpu

NUM_PARTICLES = 1
IN_F = 4 * NUM_PARTICLES   # 4
H1 = 24
H2 = 32
OUT_F = 4

_LANE = 128
_TB_MAX = 16 * 1024   # safe on v5e's default scoped VMEM; large enough to amortize per-step overhead


def _round_up(n, m):
    return ((n + m - 1) // m) * m


def dqn_kernel(x_ref, w1_ref, b1_ref, w2_ref, b2_ref, w3_ref, b3_ref, o_ref):
    # x_ref: [IN_F, tb] bf16 (batch on lanes); wN_ref: PyTorch layout [out, in] bf16;
    # bN_ref: [out, 1] f32 (broadcast across lanes).  Accumulate in f32 on the MXU.
    x = x_ref[...]                                                              # [IN_F, tb] bf16
    h1 = jnp.dot(w1_ref[...], x, preferred_element_type=jnp.float32) + b1_ref[...]
    h1 = jnp.maximum(h1, 0.0).astype(jnp.bfloat16)                              # [H1, tb]
    h2 = jnp.dot(w2_ref[...], h1, preferred_element_type=jnp.float32) + b2_ref[...]
    h2 = jnp.maximum(h2, 0.0).astype(jnp.bfloat16)                              # [H2, tb]
    out = jnp.dot(w3_ref[...], h2, preferred_element_type=jnp.float32) + b3_ref[...]
    o_ref[...] = out.astype(o_ref.dtype)                                        # [OUT_F, tb] bf16


def dqn_forward(x, w1, b1, w2, b2, w3, b3, *, tb_max=_TB_MAX):
    """x: [B, IN_F] f32; weights in PyTorch layout (w: [out, in], b: [out]). Returns [B, OUT_F] f32."""
    B = x.shape[0]

    # Batch tile: as large as possible (amortize ~0.35us/step pipeline overhead), but
    #  - capped at tb_max (v5e VMEM budget),
    #  - capped near ceil(B/2) so the grid has >=2 parallel steps (v7x dual TensorCore).
    tb = _round_up(min(tb_max, max((B + 1) // 2, 1)), _LANE)
    b_pad = _round_up(max(B, 1), _LANE)      # lane-align only (<=127 cols); NOT rounded to tb
    grid = (pl.cdiv(b_pad, tb),)             # last block may be partial; Pallas clips it

    # Layout plumbing: a single fused XLA pass (transpose + bf16 downcast + tiny lane pad).
    x_t = jnp.pad(x.T.astype(jnp.bfloat16), ((0, 0), (0, b_pad - B)))           # [IN_F, b_pad] bf16

    w1b = w1.astype(jnp.bfloat16)
    w2b = w2.astype(jnp.bfloat16)
    w3b = w3.astype(jnp.bfloat16)
    b1c = b1.reshape(H1, 1).astype(jnp.float32)
    b2c = b2.reshape(H2, 1).astype(jnp.float32)
    b3c = b3.reshape(OUT_F, 1).astype(jnp.float32)

    tile = lambda rows: pl.BlockSpec((rows, tb), lambda i: (0, i))   # batch-tiled I/O
    whole = lambda shape: pl.BlockSpec(shape, lambda i: (0, 0))      # VMEM-resident params

    out_t = pl.pallas_call(
        dqn_kernel,
        out_shape=jax.ShapeDtypeStruct((OUT_F, b_pad), jnp.bfloat16),
        grid=grid,
        in_specs=[
            tile(IN_F),                              # x tile [IN_F, tb]
            whole((H1, IN_F)), whole((H1, 1)),       # fc1
            whole((H2, H1)), whole((H2, 1)),         # fc2
            whole((OUT_F, H2)), whole((OUT_F, 1)),   # out
        ],
        out_specs=tile(OUT_F),
        compiler_params=pltpu.CompilerParams(
            dimension_semantics=("parallel",),       # independent batch tiles (v7x 2-TC shard)
            vmem_limit_bytes=32 * 1024 * 1024,
        ),
    )(x_t, w1b, b1c, w2b, b2c, w3b, b3c)

    # Fused slice + transpose + f32 upcast (single XLA pass).
    return out_t[:, :B].T.astype(jnp.float32)


def init_params(key):
    # PyTorch-Linear-style uniform init; weights kept in PyTorch layout [out, in].
    ks = jax.random.split(key, 6)

    def linear(kw, kb, fan_in, fan_out):
        bound = 1.0 / (fan_in ** 0.5)
        w = jax.random.uniform(kw, (fan_out, fan_in), jnp.float32, -bound, bound)
        b = jax.random.uniform(kb, (fan_out,), jnp.float32, -bound, bound)
        return w, b

    w1, b1 = linear(ks[0], ks[1], IN_F, H1)
    w2, b2 = linear(ks[2], ks[3], H1, H2)
    w3, b3 = linear(ks[4], ks[5], H2, OUT_F)
    return w1, b1, w2, b2, w3, b3


def _reference(x, w1, b1, w2, b2, w3, b3):
    h = jnp.maximum(x @ w1.T + b1, 0.0)
    h = jnp.maximum(h @ w2.T + b2, 0.0)
    return h @ w3.T + b3


if __name__ == "__main__":
    key = jax.random.PRNGKey(0)
    k_x, k_p, k_big = jax.random.split(key, 3)

    params = init_params(k_p)

    # Small case (matches the original module's tiny-batch use): single clipped block, tb=128.
    batch = 2
    x = jax.random.normal(k_x, (batch, IN_F), jnp.float32)
    out = jax.block_until_ready(dqn_forward(x, *params))
    ref = _reference(x, *params)
    assert out.shape == (batch, OUT_F)
    # bf16 operands/IO -> loosened tolerance vs f32 reference (as anticipated in the review).
    assert jnp.allclose(out, ref, atol=1e-1, rtol=1e-1), float(jnp.max(jnp.abs(out - ref)))

    # Larger batch exercises the multi-step pipelined grid (tb = ceil(B/2) rounded to 128 -> 2 steps).
    big_batch = 2560
    x_big = jax.random.normal(k_big, (big_batch, IN_F), jnp.float32)
    out_big = jax.block_until_ready(dqn_forward(x_big, *params))
    ref_big = _reference(x_big, *params)
    assert out_big.shape == (big_batch, OUT_F)
    assert jnp.allclose(out_big, ref_big, atol=1e-1, rtol=1e-1), float(jnp.max(jnp.abs(out_big - ref_big)))

    print("KERNEL_OK")
</pallas_src>

<mosaic_0001>
module attributes {stable_mosaic.version = 11 : i64} {
  func.func @dqn_kernel(%arg0: i32, %arg1: memref<4x128xbf16, #tpu.memory_space<vmem>>, %arg2: memref<24x4xbf16, #tpu.memory_space<vmem>>, %arg3: memref<24x1xf32, #tpu.memory_space<vmem>>, %arg4: memref<32x24xbf16, #tpu.memory_space<vmem>>, %arg5: memref<32x1xf32, #tpu.memory_space<vmem>>, %arg6: memref<4x32xbf16, #tpu.memory_space<vmem>>, %arg7: memref<4x1xf32, #tpu.memory_space<vmem>>, %arg8: memref<4x128xbf16, #tpu.memory_space<vmem>>) attributes {dimension_semantics = [#tpu.dimension_semantics<parallel>], iteration_bounds = array<i64: 1>, scalar_prefetch = 0 : i64, scratch_operands = 0 : i64, tpu.core_type = #tpu.core_type<tc>, window_params = [{transform_indices = @transform_0, window_bounds = array<i64: 4, 128>}, {pipeline_mode = #tpu.pipeline_mode<synchronous>, transform_indices = @transform_1, window_bounds = array<i64: 24, 4>}, {pipeline_mode = #tpu.pipeline_mode<synchronous>, transform_indices = @transform_2, window_bounds = array<i64: 24, 1>}, {pipeline_mode = #tpu.pipeline_mode<synchronous>, transform_indices = @transform_3, window_bounds = array<i64: 32, 24>}, {pipeline_mode = #tpu.pipeline_mode<synchronous>, transform_indices = @transform_4, window_bounds = array<i64: 32, 1>}, {pipeline_mode = #tpu.pipeline_mode<synchronous>, transform_indices = @transform_5, window_bounds = array<i64: 4, 32>}, {pipeline_mode = #tpu.pipeline_mode<synchronous>, transform_indices = @transform_6, window_bounds = array<i64: 4, 1>}, {transform_indices = @transform_7, window_bounds = array<i64: 4, 128>}]} {
    %c0 = arith.constant 0 : index
    %c0_0 = arith.constant 0 : index
    %0 = vector.load %arg1[%c0, %c0_0] : memref<4x128xbf16, #tpu.memory_space<vmem>>, vector<4x128xbf16>
    %c0_1 = arith.constant 0 : index
    %c0_2 = arith.constant 0 : index
    %1 = vector.load %arg2[%c0_1, %c0_2] : memref<24x4xbf16, #tpu.memory_space<vmem>>, vector<24x4xbf16>
    %cst = arith.constant dense<0.000000e+00> : vector<24x128xf32>
    %2 = tpu.matmul %1, %0, %cst {dimension_numbers = #tpu.dot_dimension_numbers<[1], [0], [0], [1], [0, 0, 1, 1], [], []>} : vector<24x4xbf16>, vector<4x128xbf16>, vector<24x128xf32> -> vector<24x128xf32>
    %c0_3 = arith.constant 0 : index
    %c0_4 = arith.constant 0 : index
    %3 = vector.load %arg3[%c0_3, %c0_4] : memref<24x1xf32, #tpu.memory_space<vmem>>, vector<24x1xf32>
    %4 = vector.broadcast %3 : vector<24x1xf32> to vector<24x128xf32>
    %5 = arith.addf %2, %4 : vector<24x128xf32>
    %cst_5 = arith.constant 0.000000e+00 : f32
    %6 = vector.broadcast %cst_5 : f32 to vector<24x128xf32>
    %7 = arith.maximumf %5, %6 : vector<24x128xf32>
    %8 = arith.truncf %7 : vector<24x128xf32> to vector<24x128xbf16>
    %c0_6 = arith.constant 0 : index
    %c0_7 = arith.constant 0 : index
    %9 = vector.load %arg4[%c0_6, %c0_7] : memref<32x24xbf16, #tpu.memory_space<vmem>>, vector<32x24xbf16>
    %cst_8 = arith.constant dense<0.000000e+00> : vector<32x128xf32>
    %10 = tpu.matmul %9, %8, %cst_8 {dimension_numbers = #tpu.dot_dimension_numbers<[1], [0], [0], [1], [0, 0, 1, 1], [], []>} : vector<32x24xbf16>, vector<24x128xbf16>, vector<32x128xf32> -> vector<32x128xf32>
    %c0_9 = arith.constant 0 : index
    %c0_10 = arith.constant 0 : index
    %11 = vector.load %arg5[%c0_9, %c0_10] : memref<32x1xf32, #tpu.memory_space<vmem>>, vector<32x1xf32>
    %12 = vector.broadcast %11 : vector<32x1xf32> to vector<32x128xf32>
    %13 = arith.addf %10, %12 : vector<32x128xf32>
    %cst_11 = arith.constant 0.000000e+00 : f32
    %14 = vector.broadcast %cst_11 : f32 to vector<32x128xf32>
    %15 = arith.maximumf %13, %14 : vector<32x128xf32>
    %16 = arith.truncf %15 : vector<32x128xf32> to vector<32x128xbf16>
    %c0_12 = arith.constant 0 : index
    %c0_13 = arith.constant 0 : index
    %17 = vector.load %arg6[%c0_12, %c0_13] : memref<4x32xbf16, #tpu.memory_space<vmem>>, vector<4x32xbf16>
    %cst_14 = arith.constant dense<0.000000e+00> : vector<4x128xf32>
    %18 = tpu.matmul %17, %16, %cst_14 {dimension_numbers = #tpu.dot_dimension_numbers<[1], [0], [0], [1], [0, 0, 1, 1], [], []>} : vector<4x32xbf16>, vector<32x128xbf16>, vector<4x128xf32> -> vector<4x128xf32>
    %c0_15 = arith.constant 0 : index
    %c0_16 = arith.constant 0 : index
    %19 = vector.load %arg7[%c0_15, %c0_16] : memref<4x1xf32, #tpu.memory_space<vmem>>, vector<4x1xf32>
    %20 = vector.broadcast %19 : vector<4x1xf32> to vector<4x128xf32>
    %21 = arith.addf %18, %20 : vector<4x128xf32>
    %22 = arith.truncf %21 : vector<4x128xf32> to vector<4x128xbf16>
    %c0_17 = arith.constant 0 : index
    %c0_18 = arith.constant 0 : index
    %23 = vector.load %arg8[%c0_17, %c0_18] : memref<4x128xbf16, #tpu.memory_space<vmem>>, vector<4x128xbf16>
    tpu.vector_store %arg8[%c0_17, %c0_18], %22 {strides = array<i32>} : memref<4x128xbf16, #tpu.memory_space<vmem>>, vector<4x128xbf16>,
    return
  }
  func.func @transform_0(%arg0: i32) -> (i32, i32) {
    %c0_i32 = arith.constant 0 : i32
    %c0_i32_0 = arith.constant 0 : i32
    return %c0_i32, %arg0 : i32, i32
  }
  func.func @transform_1(%arg0: i32) -> (i32, i32) {
    %c0_i32 = arith.constant 0 : i32
    %c0_i32_0 = arith.constant 0 : i32
    %c0_i32_1 = arith.constant 0 : i32
    return %c0_i32, %c0_i32_0 : i32, i32
  }
  func.func @transform_2(%arg0: i32) -> (i32, i32) {
    %c0_i32 = arith.constant 0 : i32
    %c0_i32_0 = arith.constant 0 : i32
    %c0_i32_1 = arith.constant 0 : i32
    return %c0_i32, %c0_i32_0 : i32, i32
  }
  func.func @transform_3(%arg0: i32) -> (i32, i32) {
    %c0_i32 = arith.constant 0 : i32
    %c0_i32_0 = arith.constant 0 : i32
    %c0_i32_1 = arith.constant 0 : i32
    return %c0_i32, %c0_i32_0 : i32, i32
  }
  func.func @transform_4(%arg0: i32) -> (i32, i32) {
    %c0_i32 = arith.constant 0 : i32
    %c0_i32_0 = arith.constant 0 : i32
    %c0_i32_1 = arith.constant 0 : i32
    return %c0_i32, %c0_i32_0 : i32, i32
  }
  func.func @transform_5(%arg0: i32) -> (i32, i32) {
    %c0_i32 = arith.constant 0 : i32
    %c0_i32_0 = arith.constant 0 : i32
    %c0_i32_1 = arith.constant 0 : i32
    return %c0_i32, %c0_i32_0 : i32, i32
  }
  func.func @transform_6(%arg0: i32) -> (i32, i32) {
    %c0_i32 = arith.constant 0 : i32
    %c0_i32_0 = arith.constant 0 : i32
    %c0_i32_1 = arith.constant 0 : i32
    return %c0_i32, %c0_i32_0 : i32, i32
  }
  func.func @transform_7(%arg0: i32) -> (i32, i32) {
    %c0_i32 = arith.constant 0 : i32
    %c0_i32_0 = arith.constant 0 : i32
    return %c0_i32, %arg0 : i32, i32
  }
}

</mosaic_0001>

<llo_original>
// kernel: tpu_custom_call.1
$region0: #{tpu_custom_call.1}
  #allocation0 [shape = 'u32[]', space=smem, size = 0x4, offset = 0x4, fixed_abs, tag = 'smem constant byte address 0x4 - core index']
  #allocation1 [shape = 'u32[144,128]{1,0:T(1,128)}', space=vmem, size = 0x12000, scoped, tag = 'internal scratch']
  %s0 = inlined_call_operand.vmem [shape: bf16[4,128], index: 0, kind: input, shape index: {}]
  %s1 = inlined_call_operand.vmem [shape: bf16[24,4], index: 1, kind: input, shape index: {}]
  %s2 = inlined_call_operand.vmem [shape: f32[24,1], index: 2, kind: input, shape index: {}]
  %s3 = inlined_call_operand.vmem [shape: bf16[32,24], index: 3, kind: input, shape index: {}]
  %s4 = inlined_call_operand.vmem [shape: f32[32,1], index: 4, kind: input, shape index: {}]
  %s5 = inlined_call_operand.vmem [shape: bf16[4,32], index: 5, kind: input, shape index: {}]
  %s6 = inlined_call_operand.vmem [shape: f32[4,1], index: 6, kind: input, shape index: {}]
  %s7 = inlined_call_operand.hbm [shape: bf16[4,128], index: 7, kind: output, shape index: {}]
  %s8 = sld [smem:[#allocation0]]
  $region38: #{tpu_custom_call.1} parent=0
    _
  %s10 = ssub.s32 1, %s8
  %s11 = scalar_select 0, %s10, %s8
  $region1: #{tpu_custom_call.1} parent=0
    #allocation2 [shape = 'u8[1024]{0}', space=vmem, size = 0x400, scoped, tag = 'output window, operand 0, single buffered']
    #allocation3 [shape = 's32[1]{0}', space=sflag, size = 0x4, scoped, tag = 'scoped memory for tpu_custom_call.1']
    %12 = vsyncpa [#allocation3], 0
    // Predicated region
    $region2: #{tpu_custom_call.1} parent=1 // pred_check
      _
    $region3: #{tpu_custom_call.1} parent=1 // pred_check_branch
      %14 = sbr.rel (0) target = $region5
    $region4: #{tpu_custom_call.1} parent=1 // pred_region
      _
    $region5: #{tpu_custom_call.1} parent=1 // pred_fallthru
      _
    // Predicated region
    $region6: #{tpu_custom_call.1} parent=1 // pred_check
      _
    $region7: #{tpu_custom_call.1} parent=1 // pred_check_branch
      %16 = sbr.rel (0) target = $region9
    $region8: #{tpu_custom_call.1} parent=1 // pred_region
      _
    $region9: #{tpu_custom_call.1} parent=1 // pred_fallthru
      _
    // Predicated region
    $region10: #{tpu_custom_call.1} parent=1 // pred_check
      _
    $region11: #{tpu_custom_call.1} parent=1 // pred_check_branch
      %18 = sbr.rel (0) target = $region13
    $region12: #{tpu_custom_call.1} parent=1 // pred_region
      _
    $region13: #{tpu_custom_call.1} parent=1 // pred_fallthru
      _
    // Predicated region
    $region14: #{tpu_custom_call.1} parent=1 // pred_check
      _
    $region15: #{tpu_custom_call.1} parent=1 // pred_check_branch
      %20 = sbr.rel (0) target = $region17
    $region16: #{tpu_custom_call.1} parent=1 // pred_region
      _
    $region17: #{tpu_custom_call.1} parent=1 // pred_fallthru
      _
    // Predicated region
    $region18: #{tpu_custom_call.1} parent=1 // pred_check
      _
    $region19: #{tpu_custom_call.1} parent=1 // pred_check_branch
      %22 = sbr.rel (0) target = $region21
    $region20: #{tpu_custom_call.1} parent=1 // pred_region
      _
    $region21: #{tpu_custom_call.1} parent=1 // pred_fallthru
      _
    // Predicated region
    $region22: #{tpu_custom_call.1} parent=1 // pred_check
      _
    $region23: #{tpu_custom_call.1} parent=1 // pred_check_branch
      %24 = sbr.rel (0) target = $region25
    $region24: #{tpu_custom_call.1} parent=1 // pred_region
      _
    $region25: #{tpu_custom_call.1} parent=1 // pred_fallthru
      _
    // Predicated region
    $region26: #{tpu_custom_call.1} parent=1 // pred_check
      _
    $region27: #{tpu_custom_call.1} parent=1 // pred_check_branch
      %26 = sbr.rel (0) target = $region29
    $region28: #{tpu_custom_call.1} parent=1 // pred_region
      _
    $region29: #{tpu_custom_call.1} parent=1 // pred_fallthru
      _
    %v28 = vld [vmem:[%s0] sm:$0x3]
    %v29 = vld [vmem:[%s1] sm:$0xf]
    %v30 = vld [vmem:[%s1 + $0x4] sm:$0xf]
    %v31 = vld [vmem:[%s1 + $0x8] sm:$0xf]
    %v32 = vld [vmem:[%s2] sm:$0xff]
    %v33 = vld [vmem:[%s2 + $0x8] sm:$0xff]
    %v34 = vld [vmem:[%s2 + $0x10] sm:$0xff]
    %36 = vset.pattern.permute.xlu0 0
    %37 = vperm.xlu0 %36, %v32
    %v38 = vpop.permute.xlu0 %37
    %41 = vset.pattern.permute.xlu0 0
    %42 = vperm.xlu0 %41, %v33
    %v43 = vpop.permute.xlu0 %42
    %46 = vset.pattern.permute.xlu0 0
    %47 = vperm.xlu0 %46, %v34
    %v48 = vpop.permute.xlu0 %47
    %v53 = vunpack.c.l.b16 %v29
    %v54 = vunpack.c.l.b16 %v30
    %v55 = vunpack.c.l.b16 %v31
    %v56 = vpack.c.b16 %v54, %v53
    %v57 = vpack.c.b16 %v55, %v55
    %vm58 = vcmask 31744
    %v60 = vsel %vm58, %v56, 0
    %v63 = vsel %vm58, %v57, 0
    %vm65 = vcmask 1041408
    %v67 = vsel %vm65, %v28, 0
    %69 = vmatprep.subr.bf16.mxu0 0
    %70 = vmatpush1.bf16.msra.mxu0 0
    %71 = vmatprep.subr.bf16.mxu0 0
    %72 = vmatpush1.bf16.msra.mxu0 0
    %73 = vmatprep.subr.bf16.mxu0 0
    %74 = vmatpush1.bf16.msra.mxu0 0
    %75 = vmatprep.subr.bf16.mxu0 0
    %76 = vmatpush1.bf16.msra.mxu0 0
    %77 = vmatprep.subr.bf16.mxu0 0
    %78 = vmatpush1.bf16.msra.mxu0 0
    %79 = vmatprep.subr.bf16.mxu0 0
    %80 = vmatpush1.bf16.msra.mxu0 0
    %81 = vmatprep.subr.bf16.mxu0 0
    %82 = vmatpush1.bf16.msra.mxu0 0
    %83 = vmatprep.subr.bf16.mxu0 0
    %84 = vmatpush1.bf16.msra.mxu0 %v67
    %85 = vmatprep.subr.bf16.mxu0 0
    %86 = vmatpush2.bf16.msra.mxu0 0
    %87 = vmatprep.subr.bf16.mxu0 0
    %88 = vmatpush2.bf16.msra.mxu0 0
    %89 = vmatprep.subr.bf16.mxu0 0
    %90 = vmatpush2.bf16.msra.mxu0 0
    %91 = vmatprep.subr.bf16.mxu0 0
    %92 = vmatpush2.bf16.msra.mxu0 0
    %93 = vmatprep.subr.bf16.mxu0 0
    %94 = vmatpush2.bf16.msra.mxu0 0
    %95 = vmatprep.subr.bf16.mxu0 0
    %96 = vmatpush2.bf16.msra.mxu0 0
    %97 = vmatprep.subr.bf16.mxu0 0
    %98 = vmatpush2.bf16.msra.mxu0 0
    %99 = vmatprep.subr.bf16.mxu0 0
    %100 = vmatpush2.bf16.msra.mxu0 0
    %101 = vmatprep.mubr.bf16.mxu0 0
    %102 = vmatmul.mubr.bf16.gmra.mxu0 %v60
    %v103 = vpop.f32.mrf.mxu0
    %v104 = vadd.f32 %v38, %v103
    %v105 = vpop.f32.mrf.mxu0
    %v106 = vpop.f32.mrf.mxu0
    %v107 = vadd.f32 %v43, %v106
    %v108 = vpop.f32.mrf.mxu0
    %109 = vmatprep.mubr.bf16.mxu0 0
    %110 = vmatmul.mubr.bf16.gmra.mxu0 %v63
    %v111 = vpop.f32.mrf.mxu0
    %v112 = vadd.f32 %v48, %v111
    %v113 = vpop.f32.mrf.mxu0
    %v114 = vpop.f32.mrf.mxu0
    %v115 = vpop.f32.mrf.mxu0
    %116 = vdwg.mxu0
    %v117 = vmax.f32 %v104, 0.0
    %v118 = vmax.f32 %v107, 0.0
    %v119 = vmax.f32 %v112, 0.0
    %v120 = vpack.c.bf16 %v118, %v117
    %v121 = vpack.c.bf16 %v119, %v119
    %v122 = vld [vmem:[%s3] sm:$0xf]
    %v123 = vld [vmem:[%s3 + $0x4] sm:$0xf]
    %v124 = vld [vmem:[%s3 + $0x8] sm:$0xf]
    %v125 = vld [vmem:[%s3 + $0xc] sm:$0xf]
    %v126 = vld [vmem:[%s4] sm:$0xff]
    %v127 = vld [vmem:[%s4 + $0x8] sm:$0xff]
    %v128 = vld [vmem:[%s4 + $0x10] sm:$0xff]
    %v129 = vld [vmem:[%s4 + $0x18] sm:$0xff]
    %131 = vset.pattern.permute.xlu0 0
    %132 = vperm.xlu0 %131, %v126
    %v133 = vpop.permute.xlu0 %132
    %136 = vset.pattern.permute.xlu0 0
    %137 = vperm.xlu0 %136, %v127
    %v138 = vpop.permute.xlu0 %137
    %141 = vset.pattern.permute.xlu0 0
    %142 = vperm.xlu0 %141, %v128
    %v143 = vpop.permute.xlu0 %142
    %146 = vset.pattern.permute.xlu0 0
    %147 = vperm.xlu0 %146, %v129
    %v148 = vpop.permute.xlu0 %147
    %v154 = vunpack.c.l.b16 %v122
    %v155 = vunpack.c.l.b16 %v123
    %v156 = vunpack.c.l.b16 %v124
    %v157 = vunpack.c.l.b16 %v125
    %v158 = vpack.c.b16 %v155, %v154
    %v159 = vpack.c.b16 %v157, %v156
    %vm160 = vcmask 195584
    %v162 = vsel %vm160, %v158, 0
    %v165 = vsel %vm160, %v159, 0
    %vm167 = vcmask 1043456
    %v169 = vsel %vm167, %v121, 0
    %171 = vmatprep.subr.bf16.mxu0 0
    %172 = vmatpush1.bf16.msra.mxu0 0
    %173 = vmatprep.subr.bf16.mxu0 0
    %174 = vmatpush1.bf16.msra.mxu0 0
    %175 = vmatprep.subr.bf16.mxu0 0
    %176 = vmatpush1.bf16.msra.mxu0 0
    %177 = vmatprep.subr.bf16.mxu0 0
    %178 = vmatpush1.bf16.msra.mxu0 0
    %179 = vmatprep.subr.bf16.mxu0 0
    %180 = vmatpush1.bf16.msra.mxu0 0
    %181 = vmatprep.subr.bf16.mxu0 0
    %182 = vmatpush1.bf16.msra.mxu0 0
    %183 = vmatprep.subr.bf16.mxu0 0
    %184 = vmatpush1.bf16.msra.mxu0 %v169
    %185 = vmatprep.subr.bf16.mxu0 0
    %186 = vmatpush1.bf16.msra.mxu0 %v120
    %187 = vmatprep.subr.bf16.mxu0 0
    %188 = vmatpush2.bf16.msra.mxu0 0
    %189 = vmatprep.subr.bf16.mxu0 0
    %190 = vmatpush2.bf16.msra.mxu0 0
    %191 = vmatprep.subr.bf16.mxu0 0
    %192 = vmatpush2.bf16.msra.mxu0 0
    %193 = vmatprep.subr.bf16.mxu0 0
    %194 = vmatpush2.bf16.msra.mxu0 0
    %195 = vmatprep.subr.bf16.mxu0 0
    %196 = vmatpush2.bf16.msra.mxu0 0
    %197 = vmatprep.subr.bf16.mxu0 0
    %198 = vmatpush2.bf16.msra.mxu0 0
    %199 = vmatprep.subr.bf16.mxu0 0
    %200 = vmatpush2.bf16.msra.mxu0 0
    %201 = vmatprep.subr.bf16.mxu0 0
    %202 = vmatpush2.bf16.msra.mxu0 0
    %203 = vmatprep.mubr.bf16.mxu0 0
    %204 = vmatmul.mubr.bf16.gmra.mxu0 %v162
    %v205 = vpop.f32.mrf.mxu0
    %v206 = vadd.f32 %v133, %v205
    %v207 = vpop.f32.mrf.mxu0
    %v208 = vpop.f32.mrf.mxu0
    %v209 = vadd.f32 %v138, %v208
    %v210 = vpop.f32.mrf.mxu0
    %211 = vmatprep.mubr.bf16.mxu0 0
    %212 = vmatmul.mubr.bf16.gmra.mxu0 %v165
    %v213 = vpop.f32.mrf.mxu0
    %v214 = vadd.f32 %v143, %v213
    %v215 = vpop.f32.mrf.mxu0
    %v216 = vpop.f32.mrf.mxu0
    %v217 = vadd.f32 %v148, %v216
    %v218 = vpop.f32.mrf.mxu0
    %219 = vdwg.mxu0
    %v220 = vmax.f32 %v206, 0.0
    %v221 = vmax.f32 %v209, 0.0
    %v222 = vmax.f32 %v214, 0.0
    %v223 = vmax.f32 %v217, 0.0
    %v224 = vpack.c.bf16 %v221, %v220
    %v225 = vpack.c.bf16 %v223, %v222
    %v226 = vld [vmem:[%s5] sm:$0x3]
    %v227 = vld [vmem:[%s6] sm:$0xf]
    %229 = vset.pattern.permute.xlu0 0
    %230 = vperm.xlu0 %229, %v227
    %v231 = vpop.permute.xlu0 %230
    %vm233 = vcmask 261120
    %v235 = vsel %vm233, %v226, 0
    %237 = vmatprep.subr.bf16.mxu0 0
    %238 = vmatpush1.bf16.msra.mxu0 0
    %239 = vmatprep.subr.bf16.mxu0 0
    %240 = vmatpush1.bf16.msra.mxu0 0
    %241 = vmatprep.subr.bf16.mxu0 0
    %242 = vmatpush1.bf16.msra.mxu0 0
    %243 = vmatprep.subr.bf16.mxu0 0
    %244 = vmatpush1.bf16.msra.mxu0 0
    %245 = vmatprep.subr.bf16.mxu0 0
    %246 = vmatpush1.bf16.msra.mxu0 0
    %247 = vmatprep.subr.bf16.mxu0 0
    %248 = vmatpush1.bf16.msra.mxu0 0
    %249 = vmatprep.subr.bf16.mxu0 0
    %250 = vmatpush1.bf16.msra.mxu0 %v225
    %251 = vmatprep.subr.bf16.mxu0 0
    %252 = vmatpush1.bf16.msra.mxu0 %v224
    %253 = vmatprep.subr.bf16.mxu0 0
    %254 = vmatpush2.bf16.msra.mxu0 0
    %255 = vmatprep.subr.bf16.mxu0 0
    %256 = vmatpush2.bf16.msra.mxu0 0
    %257 = vmatprep.subr.bf16.mxu0 0
    %258 = vmatpush2.bf16.msra.mxu0 0
    %259 = vmatprep.subr.bf16.mxu0 0
    %260 = vmatpush2.bf16.msra.mxu0 0
    %261 = vmatprep.subr.bf16.mxu0 0
    %262 = vmatpush2.bf16.msra.mxu0 0
    %263 = vmatprep.subr.bf16.mxu0 0
    %264 = vmatpush2.bf16.msra.mxu0 0
    %265 = vmatprep.subr.bf16.mxu0 0
    %266 = vmatpush2.bf16.msra.mxu0 0
    %267 = vmatprep.subr.bf16.mxu0 0
    %268 = vmatpush2.bf16.msra.mxu0 0
    %269 = vmatprep.mubr.bf16.mxu0 0
    %270 = vmatmul.mubr.bf16.gmra.mxu0 %v235
    %v271 = vpop.f32.mrf.mxu0
    %v272 = vadd.f32 %v231, %v271
    %v273 = vpop.f32.mrf.mxu0
    %v274 = vpop.f32.mrf.mxu0
    %v275 = vpop.f32.mrf.mxu0
    %276 = vdwg.mxu0
    %v277 = vpack.c.bf16 %v272, %v272
    %278 = vst [vmem:[#allocation2] sm:$0x3] %v277
    // Predicated region
    $region30: #{tpu_custom_call.1} parent=1 // pred_check
      _
    $region31: #{tpu_custom_call.1} parent=1 // pred_check_branch
      %280 = sbr.rel (0) target = $region33
    $region32: #{tpu_custom_call.1} parent=1 // pred_region
      %s282 = ssub.s32 32, 32
      %283 = vsyncadd [#allocation3], %s282
      %s285 = sshll.u32 [#allocation2], 4
      %s286 = int_to_ptr.vmem [resolvable:$true] %s285
      %288 = dma.vmem_to_hbm [thread:$0]  %s286, 32, %s7, [#allocation3]
    $region33: #{tpu_custom_call.1} parent=1 // pred_fallthru
      _
    // Predicated region
    $region34: #{tpu_custom_call.1} parent=1 // pred_check
      _
    $region35: #{tpu_custom_call.1} parent=1 // pred_check_branch
      %290 = sbr.rel (0) target = $region37
    $region36: #{tpu_custom_call.1} parent=1 // pred_region
      %291 = dma.done [#allocation3], 32
    $region37: #{tpu_custom_call.1} parent=1 // pred_fallthru
      _
    %292 = vsyncpa [#allocation3], 1

</llo_original>
